<compile_context>
chip_gen: v6e
topology: v6e:2x2x1
jax: 0.10.0
libtpu: 0.0.40
codegen_flags: <defaults>
</compile_context>

<pallas_src>
import jax
import jax.numpy as jnp
from jax.experimental import pallas as pl
from jax.experimental.pallas import tpu as pltpu


def _round_up(n, m):
    return ((n + m - 1) // m) * m


def _cdiv(a, b):
    return (a + b - 1) // b


def generator_kernel(x_ref, w1_ref, b1_ref, w2_ref, b2_ref, o_ref):
    # First linear layer (MXU matmul, f32 accumulate) + bias.
    h = jnp.dot(x_ref[...], w1_ref[...], preferred_element_type=jnp.float32)
    h = h + b1_ref[...]
    # LeakyReLU(0.2): single VPU max instead of compare+select.
    h = jnp.maximum(h, 0.2 * h)
    # Second linear layer + bias. For bf16 weights this downcasts the f32
    # accumulator to bf16 before the second matmul (intentional).
    y = jnp.dot(h.astype(w2_ref.dtype), w2_ref[...],
                preferred_element_type=jnp.float32)
    y = y + b2_ref[...]
    # Exact sigmoid via EUP tanh: no exp overflow, no approx reciprocal.
    o_ref[...] = (0.5 * (jnp.tanh(0.5 * y) + 1.0)).astype(o_ref.dtype)


def prepare_params(w1, b1, w2, b2):
    """Pad the hidden dim to a multiple of 128 once, at parameter creation.

    Zero padding is exact: padded W1 columns / b1 entries produce h-columns
    that are exactly 0, stay 0 through LeakyReLU, and multiply the zero rows
    padded into W2, contributing nothing to the output.
    """
    K, H = w1.shape
    N = w2.shape[1]
    Hp = _round_up(H, 128)
    b1 = jnp.asarray(b1).reshape(1, H)
    b2 = jnp.asarray(b2).reshape(1, N)
    if Hp == H:
        return w1, b1, w2, b2
    w1p = jnp.zeros((K, Hp), w1.dtype).at[:, :H].set(w1)
    b1p = jnp.zeros((1, Hp), b1.dtype).at[:, :H].set(b1)
    w2p = jnp.zeros((Hp, N), w2.dtype).at[:H, :].set(w2)
    return w1p, b1p, w2p, b2


def generator_forward(x, w1p, b1p, w2p, b2p, *, block_b=1024):
    """Generator forward. x: (B, K); (w1p, b1p, w2p, b2p) from prepare_params.
    Returns (B, N)."""
    B, K = x.shape
    Hp = w1p.shape[1]
    N = w2p.shape[1]

    itemsize = jnp.dtype(x.dtype).itemsize
    # Sub-32-bit dtypes pack rows along sublanes: keep TB a multiple of the
    # packed-row count so stores stay unmasked on the batch axis.
    row_mult = {4: 8, 2: 16, 1: 32}.get(itemsize, 8)

    TB = max(row_mult, min(block_b, _round_up(B, row_mult)))
    TB = _round_up(TB, row_mult)

    # Cap TB by a VMEM budget (covers v7x's 64 MiB physical / 32 MiB scoped
    # default and v5e's 16 MiB scoped default, which we raise below).
    w_itemsize = jnp.dtype(w1p.dtype).itemsize

    def vmem_estimate(tb):
        x_buf = 2 * tb * K * itemsize                      # double-buffered x tile
        o_buf = 2 * tb * N * itemsize                      # double-buffered out tile
        w_buf = 2 * (K * Hp + Hp + Hp * N + N) * w_itemsize  # resident weights/biases
        inter = tb * (Hp + N) * 4                          # f32 intermediates h, y
        return x_buf + o_buf + w_buf + inter

    VMEM_BUDGET = 24 * 1024 * 1024
    while TB > row_mult and vmem_estimate(TB) > VMEM_BUDGET:
        TB = max(row_mult, _round_up(TB // 2, row_mult))

    ntiles = _cdiv(B, TB)
    if ntiles > 1 and ntiles % 2 == 1:
        # Try an even grid (balanced across v7x's two TensorCores) by
        # shrinking TB; only take it if alignment actually yields an even grid
        # (never add a whole extra padded tile, which would hurt 1-TC chips).
        tb_even = _round_up(_cdiv(B, ntiles + 1), row_mult)
        if tb_even >= row_mult and _cdiv(B, tb_even) % 2 == 0:
            TB = tb_even
            ntiles = _cdiv(B, TB)
    Bp = ntiles * TB

    # Only the last partial batch tile (at most TB - 1 rows) is padded; the
    # feature dims are left at their true extents (full-dim blocks).
    if Bp != B:
        xp = jnp.zeros((Bp, K), x.dtype).at[:B].set(x)
    else:
        xp = x

    out = pl.pallas_call(
        generator_kernel,
        out_shape=jax.ShapeDtypeStruct((Bp, N), x.dtype),
        grid=(Bp // TB,),
        in_specs=[
            # x tiles move with the batch grid index; weights/biases stay
            # VMEM-resident (constant block index).
            pl.BlockSpec((TB, K), lambda i: (i, 0)),
            pl.BlockSpec((K, Hp), lambda i: (0, 0)),
            pl.BlockSpec((1, Hp), lambda i: (0, 0)),
            pl.BlockSpec((Hp, N), lambda i: (0, 0)),
            pl.BlockSpec((1, N), lambda i: (0, 0)),
        ],
        out_specs=pl.BlockSpec((TB, N), lambda i: (i, 0)),
        compiler_params=pltpu.CompilerParams(
            # Batch tiles are independent -> shard across TCs on v7x.
            dimension_semantics=("parallel",),
            # Raise v5e's 16 MiB scoped default; safe on every chip
            # (<= half of v7x's 64 MiB physical VMEM).
            vmem_limit_bytes=32 * 1024 * 1024,
        ),
    )(xp, w1p, b1p, w2p, b2p)

    return out if Bp == B else out[:B]


def reference_forward(x, w1, b1, w2, b2):
    h = x @ w1 + jnp.asarray(b1).reshape(1, -1)
    h = jnp.where(h > 0, h, 0.2 * h)
    y = h @ w2 + jnp.asarray(b2).reshape(1, -1)
    return jax.nn.sigmoid(y)


if __name__ == "__main__":
    # Shapes consistent with Generator(input_size, hidden_size, output_size).
    # Deliberately non-aligned sizes to exercise the full-dim (unpadded) K/N
    # blocks and the partial-batch-tile path.
    batch = 40
    input_size = 33
    hidden_size = 64
    output_size = 10

    key = jax.random.PRNGKey(0)
    kx, kw1, kb1, kw2, kb2 = jax.random.split(key, 5)

    x = jax.random.normal(kx, (batch, input_size), dtype=jnp.float32)
    s1 = 1.0 / jnp.sqrt(input_size)
    s2 = 1.0 / jnp.sqrt(hidden_size)
    w1 = jax.random.uniform(kw1, (input_size, hidden_size), jnp.float32, -s1, s1)
    b1 = jax.random.uniform(kb1, (hidden_size,), jnp.float32, -s1, s1)
    w2 = jax.random.uniform(kw2, (hidden_size, output_size), jnp.float32, -s2, s2)
    b2 = jax.random.uniform(kb2, (output_size,), jnp.float32, -s2, s2)

    # Pad hidden dim once, outside the forward path.
    params = prepare_params(w1, b1, w2, b2)
    ref = reference_forward(x, w1, b1, w2, b2)

    # 1) Default (large) batch tile: grid=(1,), no batch padding.
    out = generator_forward(x, *params)
    out = jax.block_until_ready(out)
    assert out.shape == (batch, output_size)
    assert jnp.allclose(out, ref, atol=2e-3, rtol=0), "mismatch vs reference (default TB)"

    # 2) Small batch tile: exercises multi-tile grid + partial-tile padding.
    out_small = generator_forward(x, *params, block_b=16)
    out_small = jax.block_until_ready(out_small)
    assert out_small.shape == (batch, output_size)
    assert jnp.allclose(out_small, ref, atol=2e-3, rtol=0), "mismatch vs reference (TB=16)"

    # 3) bf16 path: halves the dominant HBM streams; TB rounds to 16-row packs.
    params_bf16 = prepare_params(*(p.astype(jnp.bfloat16) for p in (w1, b1, w2, b2)))
    out_bf16 = generator_forward(x.astype(jnp.bfloat16), *params_bf16)
    out_bf16 = jax.block_until_ready(out_bf16)
    assert out_bf16.shape == (batch, output_size)
    assert jnp.allclose(out_bf16.astype(jnp.float32), ref, atol=5e-2, rtol=0), \
        "mismatch vs reference (bf16)"

    print("KERNEL_OK")
</pallas_src>

<mosaic_0001>
module attributes {stable_mosaic.version = 11 : i64} {
  func.func @generator_kernel(%arg0: i32, %arg1: memref<40x33xf32, #tpu.memory_space<vmem>>, %arg2: memref<33x128xf32, #tpu.memory_space<vmem>>, %arg3: memref<1x128xf32, #tpu.memory_space<vmem>>, %arg4: memref<128x10xf32, #tpu.memory_space<vmem>>, %arg5: memref<1x10xf32, #tpu.memory_space<vmem>>, %arg6: memref<40x10xf32, #tpu.memory_space<vmem>>) attributes {dimension_semantics = [#tpu.dimension_semantics<parallel>], iteration_bounds = array<i64: 1>, scalar_prefetch = 0 : i64, scratch_operands = 0 : i64, tpu.core_type = #tpu.core_type<tc>, window_params = [{transform_indices = @transform_0, window_bounds = array<i64: 40, 33>}, {pipeline_mode = #tpu.pipeline_mode<synchronous>, transform_indices = @transform_1, window_bounds = array<i64: 33, 128>}, {pipeline_mode = #tpu.pipeline_mode<synchronous>, transform_indices = @transform_2, window_bounds = array<i64: 1, 128>}, {pipeline_mode = #tpu.pipeline_mode<synchronous>, transform_indices = @transform_3, window_bounds = array<i64: 128, 10>}, {pipeline_mode = #tpu.pipeline_mode<synchronous>, transform_indices = @transform_4, window_bounds = array<i64: 1, 10>}, {transform_indices = @transform_5, window_bounds = array<i64: 40, 10>}]} {
    %c0 = arith.constant 0 : index
    %c0_0 = arith.constant 0 : index
    %0 = vector.load %arg1[%c0, %c0_0] : memref<40x33xf32, #tpu.memory_space<vmem>>, vector<40x33xf32>
    %c0_1 = arith.constant 0 : index
    %c0_2 = arith.constant 0 : index
    %1 = vector.load %arg2[%c0_1, %c0_2] : memref<33x128xf32, #tpu.memory_space<vmem>>, vector<33x128xf32>
    %cst = arith.constant dense<0.000000e+00> : vector<40x128xf32>
    %2 = tpu.matmul %0, %1, %cst {dimension_numbers = #tpu.dot_dimension_numbers<[1], [0], [0], [1], [0, 0, 1, 1], [], []>} : vector<40x33xf32>, vector<33x128xf32>, vector<40x128xf32> -> vector<40x128xf32>
    %c0_3 = arith.constant 0 : index
    %c0_4 = arith.constant 0 : index
    %3 = vector.load %arg3[%c0_3, %c0_4] : memref<1x128xf32, #tpu.memory_space<vmem>>, vector<1x128xf32>
    %4 = vector.broadcast %3 : vector<1x128xf32> to vector<40x128xf32>
    %5 = arith.addf %2, %4 : vector<40x128xf32>
    %cst_5 = arith.constant 2.000000e-01 : f32
    %6 = vector.broadcast %cst_5 : f32 to vector<40x128xf32>
    %7 = arith.mulf %6, %5 : vector<40x128xf32>
    %8 = arith.maximumf %5, %7 : vector<40x128xf32>
    %c0_6 = arith.constant 0 : index
    %c0_7 = arith.constant 0 : index
    %9 = vector.load %arg4[%c0_6, %c0_7] : memref<128x10xf32, #tpu.memory_space<vmem>>, vector<128x10xf32>
    %cst_8 = arith.constant dense<0.000000e+00> : vector<40x10xf32>
    %10 = tpu.matmul %8, %9, %cst_8 {dimension_numbers = #tpu.dot_dimension_numbers<[1], [0], [0], [1], [0, 0, 1, 1], [], []>} : vector<40x128xf32>, vector<128x10xf32>, vector<40x10xf32> -> vector<40x10xf32>
    %c0_9 = arith.constant 0 : index
    %c0_10 = arith.constant 0 : index
    %11 = vector.load %arg5[%c0_9, %c0_10] : memref<1x10xf32, #tpu.memory_space<vmem>>, vector<1x10xf32>
    %12 = vector.broadcast %11 : vector<1x10xf32> to vector<40x10xf32>
    %13 = arith.addf %10, %12 : vector<40x10xf32>
    %cst_11 = arith.constant 5.000000e-01 : f32
    %14 = vector.broadcast %cst_11 : f32 to vector<40x10xf32>
    %15 = arith.mulf %14, %13 : vector<40x10xf32>
    %16 = math.tanh %15 : vector<40x10xf32>
    %cst_12 = arith.constant 1.000000e+00 : f32
    %17 = vector.broadcast %cst_12 : f32 to vector<40x10xf32>
    %18 = arith.addf %16, %17 : vector<40x10xf32>
    %cst_13 = arith.constant 5.000000e-01 : f32
    %19 = vector.broadcast %cst_13 : f32 to vector<40x10xf32>
    %20 = arith.mulf %19, %18 : vector<40x10xf32>
    %c0_14 = arith.constant 0 : index
    %c0_15 = arith.constant 0 : index
    %21 = vector.load %arg6[%c0_14, %c0_15] : memref<40x10xf32, #tpu.memory_space<vmem>>, vector<40x10xf32>
    tpu.vector_store %arg6[%c0_14, %c0_15], %20 {strides = array<i32>} : memref<40x10xf32, #tpu.memory_space<vmem>>, vector<40x10xf32>,
    return
  }
  func.func @transform_0(%arg0: i32) -> (i32, i32) {
    %c0_i32 = arith.constant 0 : i32
    %c0_i32_0 = arith.constant 0 : i32
    return %arg0, %c0_i32 : i32, i32
  }
  func.func @transform_1(%arg0: i32) -> (i32, i32) {
    %c0_i32 = arith.constant 0 : i32
    %c0_i32_0 = arith.constant 0 : i32
    %c0_i32_1 = arith.constant 0 : i32
    return %c0_i32, %c0_i32_0 : i32, i32
  }
  func.func @transform_2(%arg0: i32) -> (i32, i32) {
    %c0_i32 = arith.constant 0 : i32
    %c0_i32_0 = arith.constant 0 : i32
    %c0_i32_1 = arith.constant 0 : i32
    return %c0_i32, %c0_i32_0 : i32, i32
  }
  func.func @transform_3(%arg0: i32) -> (i32, i32) {
    %c0_i32 = arith.constant 0 : i32
    %c0_i32_0 = arith.constant 0 : i32
    %c0_i32_1 = arith.constant 0 : i32
    return %c0_i32, %c0_i32_0 : i32, i32
  }
  func.func @transform_4(%arg0: i32) -> (i32, i32) {
    %c0_i32 = arith.constant 0 : i32
    %c0_i32_0 = arith.constant 0 : i32
    %c0_i32_1 = arith.constant 0 : i32
    return %c0_i32, %c0_i32_0 : i32, i32
  }
  func.func @transform_5(%arg0: i32) -> (i32, i32) {
    %c0_i32 = arith.constant 0 : i32
    %c0_i32_0 = arith.constant 0 : i32
    return %arg0, %c0_i32 : i32, i32
  }
}

</mosaic_0001>

<llo_original>
// kernel: tpu_custom_call.1
$region0: #{tpu_custom_call.1}
  #allocation0 [shape = 'u32[]', space=smem, size = 0x4, offset = 0x4, fixed_abs, tag = 'smem constant byte address 0x4 - core index']
  #allocation1 [shape = 'u32[144,128]{1,0:T(1,128)}', space=vmem, size = 0x12000, scoped, tag = 'internal scratch']
  %s0 = inlined_call_operand.vmem [shape: f32[40,33], index: 0, kind: input, shape index: {}]
  %s1 = inlined_call_operand.vmem [shape: f32[33,128], index: 1, kind: input, shape index: {}]
  %s2 = inlined_call_operand.vmem [shape: f32[1,128], index: 2, kind: input, shape index: {}]
  %s3 = inlined_call_operand.vmem [shape: f32[128,10], index: 3, kind: input, shape index: {}]
  %s4 = inlined_call_operand.vmem [shape: f32[1,10], index: 4, kind: input, shape index: {}]
  %s5 = inlined_call_operand.vmem [shape: f32[40,10], index: 5, kind: output, shape index: {}]
  %s6 = sld [smem:[#allocation0]]
  $region30: #{tpu_custom_call.1} parent=0
    _
  %s8 = ssub.s32 1, %s6
  %s9 = scalar_select 0, %s8, %s6
  // Predicated region
  $region2: #{tpu_custom_call.1} parent=0 // pred_check
    _
  $region3: #{tpu_custom_call.1} parent=0 // pred_check_branch
    %11 = sbr.rel (0) target = $region5
  $region4: #{tpu_custom_call.1} parent=0 // pred_region
    _
  $region5: #{tpu_custom_call.1} parent=0 // pred_fallthru
    _
  // Predicated region
  $region6: #{tpu_custom_call.1} parent=0 // pred_check
    _
  $region7: #{tpu_custom_call.1} parent=0 // pred_check_branch
    %13 = sbr.rel (0) target = $region9
  $region8: #{tpu_custom_call.1} parent=0 // pred_region
    _
  $region9: #{tpu_custom_call.1} parent=0 // pred_fallthru
    _
  // Predicated region
  $region10: #{tpu_custom_call.1} parent=0 // pred_check
    _
  $region11: #{tpu_custom_call.1} parent=0 // pred_check_branch
    %15 = sbr.rel (0) target = $region13
  $region12: #{tpu_custom_call.1} parent=0 // pred_region
    _
  $region13: #{tpu_custom_call.1} parent=0 // pred_fallthru
    _
  // Predicated region
  $region14: #{tpu_custom_call.1} parent=0 // pred_check
    _
  $region15: #{tpu_custom_call.1} parent=0 // pred_check_branch
    %17 = sbr.rel (0) target = $region17
  $region16: #{tpu_custom_call.1} parent=0 // pred_region
    _
  $region17: #{tpu_custom_call.1} parent=0 // pred_fallthru
    _
  // Predicated region
  $region18: #{tpu_custom_call.1} parent=0 // pred_check
    _
  $region19: #{tpu_custom_call.1} parent=0 // pred_check_branch
    %19 = sbr.rel (0) target = $region21
  $region20: #{tpu_custom_call.1} parent=0 // pred_region
    _
  $region21: #{tpu_custom_call.1} parent=0 // pred_fallthru
    _
  %v20 = vld [vmem:[%s0] sm:$0xff]
  %v21 = vld [vmem:[%s0 + $0x8] sm:$0xff]
  %v22 = vld [vmem:[%s0 + $0x10] sm:$0xff]
  %v23 = vld [vmem:[%s0 + $0x18] sm:$0xff]
  %v24 = vld [vmem:[%s0 + $0x20] sm:$0xff]
  %v25 = vld [vmem:[%s1] sm:$0xff]
  %v26 = vld [vmem:[%s1 + $0x8] sm:$0xff]
  %v27 = vld [vmem:[%s1 + $0x10] sm:$0xff]
  %v28 = vld [vmem:[%s1 + $0x18] sm:$0xff]
  %v29 = vld [vmem:[%s1 + $0x20] sm:$0x1]
  %v30 = vld [vmem:[%s2] sm:$0x1]
  %v32 = vlaneseq
  %v33 = vshrl.u32 %v32, 7
  %v34 = vsub.s32 0, %v33
  %v35 = vrot.slane %v30, %v34
  %vm37 = vcmask 269312
  %v39 = vsel %vm37, %v20, 0
  %v42 = vsel %vm37, %v21, 0
  %v45 = vsel %vm37, %v22, 0
  %v48 = vsel %vm37, %v23, 0
  %v51 = vsel %vm37, %v24, 0
  %vm53 = vcmask 1040384
  %v55 = vsel %vm53, %v29, 0
  %57 = vmatprep.subr.mxu0 0.0
  %58 = vmatpush1.msra.mxu0 0.0
  %59 = vmatprep.subr.mxu0 0.0
  %60 = vmatpush1.msra.mxu0 0.0
  %61 = vmatprep.subr.mxu0 0.0
  %62 = vmatpush1.msra.mxu0 0.0
  %63 = vmatprep.subr.mxu0 0.0
  %64 = vmatpush1.msra.mxu0 0.0
  %65 = vmatprep.subr.mxu0 0.0
  %66 = vmatpush1.msra.mxu0 0.0
  %67 = vmatprep.subr.mxu0 0.0
  %68 = vmatpush1.msra.mxu0 0.0
  %69 = vmatprep.subr.mxu0 0.0
  %70 = vmatpush1.msra.mxu0 0.0
  %71 = vmatprep.subr.mxu0 0.0
  %72 = vmatpush1.msra.mxu0 0.0
  %73 = vmatprep.subr.mxu0 0.0
  %74 = vmatpush1.msra.mxu0 0.0
  %75 = vmatprep.subr.mxu0 0.0
  %76 = vmatpush1.msra.mxu0 0.0
  %77 = vmatprep.subr.mxu0 0.0
  %78 = vmatpush1.msra.mxu0 0.0
  %79 = vmatprep.subr.mxu0 0.0
  %80 = vmatpush1.msra.mxu0 %v55
  %81 = vmatprep.subr.mxu0 0.0
  %82 = vmatpush1.msra.mxu0 %v28
  %83 = vmatprep.subr.mxu0 0.0
  %84 = vmatpush1.msra.mxu0 %v27
  %85 = vmatprep.subr.mxu0 0.0
  %86 = vmatpush1.msra.mxu0 %v26
  %87 = vmatprep.subr.mxu0 0.0
  %88 = vmatpush1.msra.mxu0 %v25
  %89 = vmatprep.subr.mxu0 0.0
  %90 = vmatpush2.msra.mxu0 0.0
  %91 = vmatprep.subr.mxu0 0.0
  %92 = vmatpush2.msra.mxu0 0.0
  %93 = vmatprep.subr.mxu0 0.0
  %94 = vmatpush2.msra.mxu0 0.0
  %95 = vmatprep.subr.mxu0 0.0
  %96 = vmatpush2.msra.mxu0 0.0
  %97 = vmatprep.subr.mxu0 0.0
  %98 = vmatpush2.msra.mxu0 0.0
  %99 = vmatprep.subr.mxu0 0.0
  %100 = vmatpush2.msra.mxu0 0.0
  %101 = vmatprep.subr.mxu0 0.0
  %102 = vmatpush2.msra.mxu0 0.0
  %103 = vmatprep.subr.mxu0 0.0
  %104 = vmatpush2.msra.mxu0 0.0
  %105 = vmatprep.subr.mxu0 0.0
  %106 = vmatpush2.msra.mxu0 0.0
  %107 = vmatprep.subr.mxu0 0.0
  %108 = vmatpush2.msra.mxu0 0.0
  %109 = vmatprep.subr.mxu0 0.0
  %110 = vmatpush2.msra.mxu0 0.0
  %111 = vmatprep.subr.mxu0 0.0
  %112 = vmatpush2.msra.mxu0 0.0
  %113 = vmatprep.subr.mxu0 0.0
  %114 = vmatpush2.msra.mxu0 0.0
  %115 = vmatprep.subr.mxu0 0.0
  %116 = vmatpush2.msra.mxu0 0.0
  %117 = vmatprep.subr.mxu0 0.0
  %118 = vmatpush2.msra.mxu0 0.0
  %119 = vmatprep.subr.mxu0 0.0
  %120 = vmatpush2.msra.mxu0 0.0
  %121 = vmatprep.mubr.f32.mxu0 0.0
  %122 = vmatmul.mubr.f32.gmra.mxu0 %v39
  %v123 = vpop.f32.mrf.mxu0
  %v124 = vadd.f32 %v35, %v123
  %v125 = vpop.f32.mrf.mxu0
  %126 = vmatprep.mubr.f32.mxu0 0.0
  %127 = vmatmul.mubr.f32.gmra.mxu0 %v42
  %v128 = vpop.f32.mrf.mxu0
  %v129 = vadd.f32 %v35, %v128
  %v130 = vpop.f32.mrf.mxu0
  %131 = vmatprep.mubr.f32.mxu0 0.0
  %132 = vmatmul.mubr.f32.gmra.mxu0 %v45
  %v133 = vpop.f32.mrf.mxu0
  %v134 = vadd.f32 %v35, %v133
  %v135 = vpop.f32.mrf.mxu0
  %136 = vmatprep.mubr.f32.mxu0 0.0
  %137 = vmatmul.mubr.f32.gmra.mxu0 %v48
  %v138 = vpop.f32.mrf.mxu0
  %v139 = vadd.f32 %v35, %v138
  %v140 = vpop.f32.mrf.mxu0
  %141 = vmatprep.mubr.f32.mxu0 0.0
  %142 = vmatmul.mubr.f32.gmra.mxu0 %v51
  %v143 = vpop.f32.mrf.mxu0
  %v144 = vadd.f32 %v35, %v143
  %v145 = vpop.f32.mrf.mxu0
  %146 = vdwg.mxu0
  %v147 = vmul.f32 %v124, 0.2
  %v148 = vmul.f32 %v129, 0.2
  %v149 = vmul.f32 %v134, 0.2
  %v150 = vmul.f32 %v139, 0.2
  %v151 = vmul.f32 %v144, 0.2
  %v152 = vmax.f32 %v124, %v147
  %v153 = vmax.f32 %v129, %v148
  %v154 = vmax.f32 %v134, %v149
  %v155 = vmax.f32 %v139, %v150
  %v156 = vmax.f32 %v144, %v151
  %v157 = vld [vmem:[%s3] sm:$0xff]
  %v158 = vld [vmem:[%s3 + $0x8] sm:$0xff]
  %v159 = vld [vmem:[%s3 + $0x10] sm:$0xff]
  %v160 = vld [vmem:[%s3 + $0x18] sm:$0xff]
  %v161 = vld [vmem:[%s3 + $0x20] sm:$0xff]
  %v162 = vld [vmem:[%s3 + $0x28] sm:$0xff]
  %v163 = vld [vmem:[%s3 + $0x30] sm:$0xff]
  %v164 = vld [vmem:[%s3 + $0x38] sm:$0xff]
  %v165 = vld [vmem:[%s3 + $0x40] sm:$0xff]
  %v166 = vld [vmem:[%s3 + $0x48] sm:$0xff]
  %v167 = vld [vmem:[%s3 + $0x50] sm:$0xff]
  %v168 = vld [vmem:[%s3 + $0x58] sm:$0xff]
  %v169 = vld [vmem:[%s3 + $0x60] sm:$0xff]
  %v170 = vld [vmem:[%s3 + $0x68] sm:$0xff]
  %v171 = vld [vmem:[%s3 + $0x70] sm:$0xff]
  %v172 = vld [vmem:[%s3 + $0x78] sm:$0xff]
  %v173 = vld [vmem:[%s4] sm:$0x1]
  %v175 = vlaneseq
  %v176 = vshrl.u32 %v175, 7
  %v177 = vsub.s32 0, %v176
  %v178 = vrot.slane %v173, %v177
  %180 = vmatprep.subr.mxu0 0.0
  %181 = vmatpush1.msra.mxu0 %v172
  %182 = vmatprep.subr.mxu0 0.0
  %183 = vmatpush1.msra.mxu0 %v171
  %184 = vmatprep.subr.mxu0 0.0
  %185 = vmatpush1.msra.mxu0 %v170
  %186 = vmatprep.subr.mxu0 0.0
  %187 = vmatpush1.msra.mxu0 %v169
  %188 = vmatprep.subr.mxu0 0.0
  %189 = vmatpush1.msra.mxu0 %v168
  %190 = vmatprep.subr.mxu0 0.0
  %191 = vmatpush1.msra.mxu0 %v167
  %192 = vmatprep.subr.mxu0 0.0
  %193 = vmatpush1.msra.mxu0 %v166
  %194 = vmatprep.subr.mxu0 0.0
  %195 = vmatpush1.msra.mxu0 %v165
  %196 = vmatprep.subr.mxu0 0.0
  %197 = vmatpush1.msra.mxu0 %v164
  %198 = vmatprep.subr.mxu0 0.0
  %199 = vmatpush1.msra.mxu0 %v163
  %200 = vmatprep.subr.mxu0 0.0
  %201 = vmatpush1.msra.mxu0 %v162
  %202 = vmatprep.subr.mxu0 0.0
  %203 = vmatpush1.msra.mxu0 %v161
  %204 = vmatprep.subr.mxu0 0.0
  %205 = vmatpush1.msra.mxu0 %v160
  %206 = vmatprep.subr.mxu0 0.0
  %207 = vmatpush1.msra.mxu0 %v159
  %208 = vmatprep.subr.mxu0 0.0
  %209 = vmatpush1.msra.mxu0 %v158
  %210 = vmatprep.subr.mxu0 0.0
  %211 = vmatpush1.msra.mxu0 %v157
  %212 = vmatprep.subr.mxu0 0.0
  %213 = vmatpush2.msra.mxu0 0.0
  %214 = vmatprep.subr.mxu0 0.0
  %215 = vmatpush2.msra.mxu0 0.0
  %216 = vmatprep.subr.mxu0 0.0
  %217 = vmatpush2.msra.mxu0 0.0
  %218 = vmatprep.subr.mxu0 0.0
  %219 = vmatpush2.msra.mxu0 0.0
  %220 = vmatprep.subr.mxu0 0.0
  %221 = vmatpush2.msra.mxu0 0.0
  %222 = vmatprep.subr.mxu0 0.0
  %223 = vmatpush2.msra.mxu0 0.0
  %224 = vmatprep.subr.mxu0 0.0
  %225 = vmatpush2.msra.mxu0 0.0
  %226 = vmatprep.subr.mxu0 0.0
  %227 = vmatpush2.msra.mxu0 0.0
  %228 = vmatprep.subr.mxu0 0.0
  %229 = vmatpush2.msra.mxu0 0.0
  %230 = vmatprep.subr.mxu0 0.0
  %231 = vmatpush2.msra.mxu0 0.0
  %232 = vmatprep.subr.mxu0 0.0
  %233 = vmatpush2.msra.mxu0 0.0
  %234 = vmatprep.subr.mxu0 0.0
  %235 = vmatpush2.msra.mxu0 0.0
  %236 = vmatprep.subr.mxu0 0.0
  %237 = vmatpush2.msra.mxu0 0.0
  %238 = vmatprep.subr.mxu0 0.0
  %239 = vmatpush2.msra.mxu0 0.0
  %240 = vmatprep.subr.mxu0 0.0
  %241 = vmatpush2.msra.mxu0 0.0
  %242 = vmatprep.subr.mxu0 0.0
  %243 = vmatpush2.msra.mxu0 0.0
  %244 = vmatprep.mubr.f32.mxu0 0.0
  %245 = vmatmul.mubr.f32.gmra.mxu0 %v152
  %v246 = vpop.f32.mrf.mxu0
  %v247 = vadd.f32 %v178, %v246
  %v248 = vpop.f32.mrf.mxu0
  %249 = vmatprep.mubr.f32.mxu0 0.0
  %250 = vmatmul.mubr.f32.gmra.mxu0 %v153
  %v251 = vpop.f32.mrf.mxu0
  %v252 = vadd.f32 %v178, %v251
  %v253 = vpop.f32.mrf.mxu0
  %254 = vmatprep.mubr.f32.mxu0 0.0
  %255 = vmatmul.mubr.f32.gmra.mxu0 %v154
  %v256 = vpop.f32.mrf.mxu0
  %v257 = vadd.f32 %v178, %v256
  %v258 = vpop.f32.mrf.mxu0
  %259 = vmatprep.mubr.f32.mxu0 0.0
  %260 = vmatmul.mubr.f32.gmra.mxu0 %v155
  %v261 = vpop.f32.mrf.mxu0
  %v262 = vadd.f32 %v178, %v261
  %v263 = vpop.f32.mrf.mxu0
  %264 = vmatprep.mubr.f32.mxu0 0.0
  %265 = vmatmul.mubr.f32.gmra.mxu0 %v156
  %v266 = vpop.f32.mrf.mxu0
  %v267 = vadd.f32 %v178, %v266
  %v268 = vpop.f32.mrf.mxu0
  %269 = vdwg.mxu0
  %v270 = vmul.f32 %v247, 0.5
  %v271 = vmul.f32 %v252, 0.5
  %v272 = vmul.f32 %v257, 0.5
  %v273 = vmul.f32 %v262, 0.5
  %v274 = vmul.f32 %v267, 0.5
  %v275 = vtanh.pop %v270
  %v276 = vtanh.pop %v271
  %v277 = vtanh.pop %v272
  %v278 = vtanh.pop %v273
  %v279 = vtanh.pop %v274
  %v280 = vadd.f32 %v275, 1.0
  %v281 = vadd.f32 %v276, 1.0
  %v282 = vadd.f32 %v277, 1.0
  %v283 = vadd.f32 %v278, 1.0
  %v284 = vadd.f32 %v279, 1.0
  %v285 = vmul.f32 %v280, 0.5
  %v286 = vmul.f32 %v281, 0.5
  %v287 = vmul.f32 %v282, 0.5
  %v288 = vmul.f32 %v283, 0.5
  %v289 = vmul.f32 %v284, 0.5
  %vm290 = vcmask 80896
  %291 = vst.msk [vmem:[%s5] sm:$0xff] %vm290, %v285
  %292 = vst.msk [vmem:[%s5 + $0x8] sm:$0xff] %vm290, %v286
  %293 = vst.msk [vmem:[%s5 + $0x10] sm:$0xff] %vm290, %v287
  %294 = vst.msk [vmem:[%s5 + $0x18] sm:$0xff] %vm290, %v288
  %295 = vst.msk [vmem:[%s5 + $0x20] sm:$0xff] %vm290, %v289
  // Predicated region
  $region22: #{tpu_custom_call.1} parent=0 // pred_check
    _
  $region23: #{tpu_custom_call.1} parent=0 // pred_check_branch
    %297 = sbr.rel (0) target = $region25
  $region24: #{tpu_custom_call.1} parent=0 // pred_region
    _
  $region25: #{tpu_custom_call.1} parent=0 // pred_fallthru
    _
  // Predicated region
  $region26: #{tpu_custom_call.1} parent=0 // pred_check
    _
  $region27: #{tpu_custom_call.1} parent=0 // pred_check_branch
    %299 = sbr.rel (0) target = $region29
  $region28: #{tpu_custom_call.1} parent=0 // pred_region
    _
  $region29: #{tpu_custom_call.1} parent=0 // pred_fallthru
    _

</llo_original>
